<compile_context>
chip_gen: v5e
topology: v5e:2x2
jax: 0.10.0
libtpu: 0.0.40
codegen_flags: <defaults>
</compile_context>

<pallas_src>
import functools
import math

import jax
import jax.numpy as jnp
from jax.experimental import pallas as pl
from jax.experimental.pallas import tpu as pltpu

EPS = 1e-5
_MAX_ROW_TILE = 8192        # latency/VMEM sanity cap; real cap is VMEM-derived
_MAX_PACK_GROUPS = 8        # masked-reduce cost scales with group; raising this
                            # would want the MXU segmented-sum path (see header)


def _ln_kernel(x_ref, wb_ref, o_ref, *, group, c, eps):
    """LayerNorm over lane segments of width `c`; `group` logical rows per kernel row."""
    x = x_ref[...].astype(jnp.float32)            # (row_tile, group * c)
    w = wb_ref[0:1, :].astype(jnp.float32)        # (1, group * c)
    b = wb_ref[1:2, :].astype(jnp.float32)        # (1, group * c)

    if group == 1:
        # Plain path (C is a multiple of 128, or packing not applicable).
        mu = jnp.mean(x, axis=-1, keepdims=True)
        xc = x - mu
        var = jnp.mean(xc * xc, axis=-1, keepdims=True)   # unbiased=False
        inv = jax.lax.rsqrt(var + eps)                     # compact (T, 1)
    else:
        # Segmented (per logical row) statistics with full-lane-width masked
        # reduces (XLU) + selects (VPU).  Everything stays 128-lane dense; no
        # in-kernel reshape/relayout, no MXU.  Masks are rebuilt per iteration
        # so only one (T, gc) mask is live at a time.
        lane = jax.lax.broadcasted_iota(jnp.int32, x.shape, 1)
        inv_c = jnp.float32(1.0 / c)

        # Pass 1: per-segment mean, broadcast back into that segment's lanes.
        mu = jnp.zeros_like(x)
        for g in range(group):
            m = (lane >= g * c) & (lane < (g + 1) * c)
            s = jnp.sum(jnp.where(m, x, 0.0), axis=-1, keepdims=True) * inv_c
            mu = jnp.where(m, s, mu)
        xc = x - mu

        # Pass 2: per-segment variance; rsqrt on the compact (T, 1) statistic
        # (c-fold fewer EUP ops than rsqrt over the full slab), then broadcast
        # only the reciprocal stddev back.  Two-pass form kept in f32 (no
        # E[x^2] - mu^2 cancellation risk).
        sq = xc * xc
        inv = jnp.zeros_like(x)
        for g in range(group):
            m = (lane >= g * c) & (lane < (g + 1) * c)
            v = jnp.sum(jnp.where(m, sq, 0.0), axis=-1, keepdims=True) * inv_c
            r = jax.lax.rsqrt(v + eps)
            inv = jnp.where(m, r, inv)

    o_ref[...] = (xc * inv * w + b).astype(o_ref.dtype)


def _physical_vmem_bytes():
    try:
        info = pltpu.get_tpu_info()
        return int(getattr(info, "vmem_capacity_bytes", 64 * 2**20))
    except Exception:
        return 64 * 2**20                         # conservative (v7x per-core VMEM)


def _choose_tiling(rows, lane_width, in_bytes, out_bytes, vmem_bytes):
    """Pick (row_tile, grid): biggest VMEM-fitting tile, even balanced grid."""
    # Per-row footprint: 2 double-buffered input blocks + 2 output blocks
    # (+1 extra store buffer slack) and ~6 f32-wide kernel temporaries
    # (x, mu/xc, sq, inv, iota, one mask).
    per_row = lane_width * (2 * in_bytes + 2 * out_bytes + 6 * 4)
    budget = max(vmem_bytes // 2, 8 << 20)
    cap = budget // per_row
    cap = max(8, min(_MAX_ROW_TILE, (cap // 8) * 8))
    if rows <= 8:
        return max(rows, 1), 1
    # Even number of near-equal blocks so both v7x TensorCores get balanced
    # work under dimension_semantics=("parallel",).  No effect on 1-TC parts.
    nblk = 2 * ((rows + 2 * cap - 1) // (2 * cap))
    per_blk = (rows + nblk - 1) // nblk
    row_tile = max(8, min(cap, ((per_blk + 7) // 8) * 8))
    grid = (rows + row_tile - 1) // row_tile
    return row_tile, grid


@jax.jit
def with_bias_layernorm(x, weight, bias):
    """x: (..., C); weight/bias: (C,).  Normalizes over the last dim (eps=1e-5)."""
    orig_shape = x.shape
    c = int(orig_shape[-1])
    rows = 1
    for d in orig_shape[:-1]:
        rows *= int(d)

    # Lane-dense packing: G logical rows per kernel row so lane width % 128 == 0.
    g = 128 // math.gcd(c, 128)
    group = g if 1 < g <= _MAX_PACK_GROUPS else 1

    x2 = x.reshape(rows, c)
    rows_p = rows
    if group > 1:
        # Pad the row count to a multiple of G (rows-only zero pad, cheap) so
        # packing always applies; eps keeps rsqrt finite on the zero rows and
        # the padded rows are sliced away below.
        rows_p = -(-rows // group) * group
        if rows_p != rows:
            x2 = jnp.pad(x2, ((0, rows_p - rows), (0, 0)))

    gc = group * c
    rows_g = rows_p // group
    x2 = x2.reshape(rows_g, gc)

    # Single (2, gc) weight+bias operand: one constant DMA / VMEM buffer.
    wb = jnp.stack([jnp.asarray(weight), jnp.asarray(bias)]).reshape(2, c)
    if group > 1:
        wb = jnp.tile(wb, (1, group))

    phys_vmem = _physical_vmem_bytes()
    lane_width = (-(-gc // 128)) * 128            # lane-padded width in VMEM
    in_bytes = x.dtype.itemsize
    out_bytes = in_bytes
    row_tile, grid = _choose_tiling(rows_g, lane_width, in_bytes, out_bytes, phys_vmem)

    # VMEM limit from the actual footprint (+headroom), capped at 90% physical.
    block_bytes = row_tile * lane_width
    footprint = block_bytes * (2 * in_bytes + 2 * out_bytes + 6 * 4) + 16 * lane_width * 4
    vmem_limit = int(min(phys_vmem * 9 // 10, footprint + footprint // 4 + (4 << 20)))
    vmem_limit = max(vmem_limit, 32 << 20)

    kernel = functools.partial(_ln_kernel, group=group, c=c, eps=EPS)

    out = pl.pallas_call(
        kernel,
        out_shape=jax.ShapeDtypeStruct((rows_g, gc), x.dtype),
        grid_spec=pltpu.PrefetchScalarGridSpec(
            num_scalar_prefetch=0,
            grid=(grid,),                          # partial tail block: OOB stores dropped
            in_specs=[
                pl.BlockSpec((row_tile, gc), lambda i: (i, 0)),
                pl.BlockSpec((2, gc), lambda i: (0, 0)),   # constant block: fetched once
            ],
            out_specs=pl.BlockSpec((row_tile, gc), lambda i: (i, 0)),
        ),
        compiler_params=pltpu.CompilerParams(
            dimension_semantics=("parallel",),
            vmem_limit_bytes=vmem_limit,
        ),
    )(x2, wb)

    out = out.reshape(rows_p, c)
    if rows_p != rows:
        out = out[:rows]
    return out.reshape(orig_shape)


def _reference(x, weight, bias):
    x32 = x.astype(jnp.float32)
    mu = jnp.mean(x32, axis=-1, keepdims=True)
    var = jnp.mean((x32 - mu) ** 2, axis=-1, keepdims=True)
    return ((x32 - mu) / jnp.sqrt(var + EPS) * weight + bias).astype(x.dtype)


if __name__ == "__main__":
    key = jax.random.PRNGKey(0)

    # Primary case: batch=2, seq=64, hidden(channels)=32 -> lane-packed path (G=4).
    B, N, C = 2, 64, 32
    x = jax.random.normal(key, (B, N, C), dtype=jnp.float32)
    weight = jnp.ones((C,), jnp.float32) + 0.01 * jnp.arange(C, dtype=jnp.float32)
    bias = 0.01 * jnp.arange(C, dtype=jnp.float32)

    out = jax.block_until_ready(with_bias_layernorm(x, weight, bias))
    ref = _reference(x, weight, bias)
    assert out.shape == x.shape and out.dtype == x.dtype
    assert float(jnp.max(jnp.abs(out - ref))) < 2e-4

    # Secondary case: odd row count, C=48 -> now also lane-packed (G=8) via the
    # rows-only zero pad; exercises the partial tail block / output slice path.
    B2, N2, C2 = 3, 33, 48
    x2 = jax.random.normal(jax.random.PRNGKey(1), (B2, N2, C2), dtype=jnp.float32)
    w2 = 1.0 + 0.02 * jnp.arange(C2, dtype=jnp.float32)
    b2 = -0.01 * jnp.arange(C2, dtype=jnp.float32)
    out2 = jax.block_until_ready(with_bias_layernorm(x2, w2, b2))
    assert float(jnp.max(jnp.abs(out2 - _reference(x2, w2, b2)))) < 2e-4

    print("KERNEL_OK")
</pallas_src>

<mosaic_0001>
module attributes {stable_mosaic.version = 11 : i64} {
  func.func @_ln_kernel(%arg0: i32, %arg1: memref<16x128xf32, #tpu.memory_space<vmem>>, %arg2: memref<2x128xf32, #tpu.memory_space<vmem>>, %arg3: memref<16x128xf32, #tpu.memory_space<vmem>>) attributes {dimension_semantics = [#tpu.dimension_semantics<parallel>], iteration_bounds = array<i64: 2>, scalar_prefetch = 0 : i64, scratch_operands = 0 : i64, tpu.core_type = #tpu.core_type<tc>, window_params = [{transform_indices = @transform_0, window_bounds = array<i64: 16, 128>}, {pipeline_mode = #tpu.pipeline_mode<synchronous>, transform_indices = @transform_1, window_bounds = array<i64: 2, 128>}, {transform_indices = @transform_2, window_bounds = array<i64: 16, 128>}]} {
    %c0 = arith.constant 0 : index
    %c0_0 = arith.constant 0 : index
    %0 = vector.load %arg1[%c0, %c0_0] : memref<16x128xf32, #tpu.memory_space<vmem>>, vector<16x128xf32>
    %c0_1 = arith.constant 0 : index
    %c0_2 = arith.constant 0 : index
    %1 = vector.load %arg2[%c0_1, %c0_2] : memref<2x128xf32, #tpu.memory_space<vmem>>, vector<1x128xf32>
    %c1 = arith.constant 1 : index
    %c0_3 = arith.constant 0 : index
    %2 = vector.load %arg2[%c1, %c0_3] : memref<2x128xf32, #tpu.memory_space<vmem>>, vector<1x128xf32>
    %3 = tpu.iota {dimensions = array<i32: 1>} : vector<16x128xi32>
    %cst = arith.constant 0.000000e+00 : f32
    %4 = vector.broadcast %cst : f32 to vector<16x128xf32>
    %c0_i32 = arith.constant 0 : i32
    %5 = vector.broadcast %c0_i32 : i32 to vector<16x128xi32>
    %6 = arith.cmpi sge, %3, %5 : vector<16x128xi32>
    %c32_i32 = arith.constant 32 : i32
    %7 = vector.broadcast %c32_i32 : i32 to vector<16x128xi32>
    %8 = arith.cmpi slt, %3, %7 : vector<16x128xi32>
    %9 = arith.andi %6, %8 : vector<16x128xi1>
    %cst_4 = arith.constant 0.000000e+00 : f32
    %10 = vector.broadcast %cst_4 : f32 to vector<16x128xf32>
    %11 = arith.select %9, %0, %10 : vector<16x128xi1>, vector<16x128xf32>
    %cst_5 = arith.constant dense<0.000000e+00> : vector<16xf32>
    %12 = vector.multi_reduction <add>, %11, %cst_5 [1] : vector<16x128xf32> to vector<16xf32>
    %13 = vector.shape_cast %12 : vector<16xf32> to vector<16x1xf32>
    %cst_6 = arith.constant 3.125000e-02 : f32
    %14 = vector.broadcast %cst_6 : f32 to vector<16x1xf32>
    %15 = arith.mulf %13, %14 : vector<16x1xf32>
    %16 = vector.shape_cast %15 : vector<16x1xf32> to vector<16x1xf32>
    %17 = vector.broadcast %16 : vector<16x1xf32> to vector<16x128xf32>
    %18 = arith.select %9, %17, %4 : vector<16x128xi1>, vector<16x128xf32>
    %c32_i32_7 = arith.constant 32 : i32
    %19 = vector.broadcast %c32_i32_7 : i32 to vector<16x128xi32>
    %20 = arith.cmpi sge, %3, %19 : vector<16x128xi32>
    %c64_i32 = arith.constant 64 : i32
    %21 = vector.broadcast %c64_i32 : i32 to vector<16x128xi32>
    %22 = arith.cmpi slt, %3, %21 : vector<16x128xi32>
    %23 = arith.andi %20, %22 : vector<16x128xi1>
    %cst_8 = arith.constant 0.000000e+00 : f32
    %24 = vector.broadcast %cst_8 : f32 to vector<16x128xf32>
    %25 = arith.select %23, %0, %24 : vector<16x128xi1>, vector<16x128xf32>
    %cst_9 = arith.constant dense<0.000000e+00> : vector<16xf32>
    %26 = vector.multi_reduction <add>, %25, %cst_9 [1] : vector<16x128xf32> to vector<16xf32>
    %27 = vector.shape_cast %26 : vector<16xf32> to vector<16x1xf32>
    %cst_10 = arith.constant 3.125000e-02 : f32
    %28 = vector.broadcast %cst_10 : f32 to vector<16x1xf32>
    %29 = arith.mulf %27, %28 : vector<16x1xf32>
    %30 = vector.shape_cast %29 : vector<16x1xf32> to vector<16x1xf32>
    %31 = vector.broadcast %30 : vector<16x1xf32> to vector<16x128xf32>
    %32 = arith.select %23, %31, %18 : vector<16x128xi1>, vector<16x128xf32>
    %c64_i32_11 = arith.constant 64 : i32
    %33 = vector.broadcast %c64_i32_11 : i32 to vector<16x128xi32>
    %34 = arith.cmpi sge, %3, %33 : vector<16x128xi32>
    %c96_i32 = arith.constant 96 : i32
    %35 = vector.broadcast %c96_i32 : i32 to vector<16x128xi32>
    %36 = arith.cmpi slt, %3, %35 : vector<16x128xi32>
    %37 = arith.andi %34, %36 : vector<16x128xi1>
    %cst_12 = arith.constant 0.000000e+00 : f32
    %38 = vector.broadcast %cst_12 : f32 to vector<16x128xf32>
    %39 = arith.select %37, %0, %38 : vector<16x128xi1>, vector<16x128xf32>
    %cst_13 = arith.constant dense<0.000000e+00> : vector<16xf32>
    %40 = vector.multi_reduction <add>, %39, %cst_13 [1] : vector<16x128xf32> to vector<16xf32>
    %41 = vector.shape_cast %40 : vector<16xf32> to vector<16x1xf32>
    %cst_14 = arith.constant 3.125000e-02 : f32
    %42 = vector.broadcast %cst_14 : f32 to vector<16x1xf32>
    %43 = arith.mulf %41, %42 : vector<16x1xf32>
    %44 = vector.shape_cast %43 : vector<16x1xf32> to vector<16x1xf32>
    %45 = vector.broadcast %44 : vector<16x1xf32> to vector<16x128xf32>
    %46 = arith.select %37, %45, %32 : vector<16x128xi1>, vector<16x128xf32>
    %c96_i32_15 = arith.constant 96 : i32
    %47 = vector.broadcast %c96_i32_15 : i32 to vector<16x128xi32>
    %48 = arith.cmpi sge, %3, %47 : vector<16x128xi32>
    %c128_i32 = arith.constant 128 : i32
    %49 = vector.broadcast %c128_i32 : i32 to vector<16x128xi32>
    %50 = arith.cmpi slt, %3, %49 : vector<16x128xi32>
    %51 = arith.andi %48, %50 : vector<16x128xi1>
    %cst_16 = arith.constant 0.000000e+00 : f32
    %52 = vector.broadcast %cst_16 : f32 to vector<16x128xf32>
    %53 = arith.select %51, %0, %52 : vector<16x128xi1>, vector<16x128xf32>
    %cst_17 = arith.constant dense<0.000000e+00> : vector<16xf32>
    %54 = vector.multi_reduction <add>, %53, %cst_17 [1] : vector<16x128xf32> to vector<16xf32>
    %55 = vector.shape_cast %54 : vector<16xf32> to vector<16x1xf32>
    %cst_18 = arith.constant 3.125000e-02 : f32
    %56 = vector.broadcast %cst_18 : f32 to vector<16x1xf32>
    %57 = arith.mulf %55, %56 : vector<16x1xf32>
    %58 = vector.shape_cast %57 : vector<16x1xf32> to vector<16x1xf32>
    %59 = vector.broadcast %58 : vector<16x1xf32> to vector<16x128xf32>
    %60 = arith.select %51, %59, %46 : vector<16x128xi1>, vector<16x128xf32>
    %61 = arith.subf %0, %60 : vector<16x128xf32>
    %62 = arith.mulf %61, %61 : vector<16x128xf32>
    %cst_19 = arith.constant 0.000000e+00 : f32
    %63 = vector.broadcast %cst_19 : f32 to vector<16x128xf32>
    %c0_i32_20 = arith.constant 0 : i32
    %64 = vector.broadcast %c0_i32_20 : i32 to vector<16x128xi32>
    %65 = arith.cmpi sge, %3, %64 : vector<16x128xi32>
    %c32_i32_21 = arith.constant 32 : i32
    %66 = vector.broadcast %c32_i32_21 : i32 to vector<16x128xi32>
    %67 = arith.cmpi slt, %3, %66 : vector<16x128xi32>
    %68 = arith.andi %65, %67 : vector<16x128xi1>
    %cst_22 = arith.constant 0.000000e+00 : f32
    %69 = vector.broadcast %cst_22 : f32 to vector<16x128xf32>
    %70 = arith.select %68, %62, %69 : vector<16x128xi1>, vector<16x128xf32>
    %cst_23 = arith.constant dense<0.000000e+00> : vector<16xf32>
    %71 = vector.multi_reduction <add>, %70, %cst_23 [1] : vector<16x128xf32> to vector<16xf32>
    %72 = vector.shape_cast %71 : vector<16xf32> to vector<16x1xf32>
    %cst_24 = arith.constant 3.125000e-02 : f32
    %73 = vector.broadcast %cst_24 : f32 to vector<16x1xf32>
    %74 = arith.mulf %72, %73 : vector<16x1xf32>
    %cst_25 = arith.constant 9.99999974E-6 : f32
    %75 = vector.broadcast %cst_25 : f32 to vector<16x1xf32>
    %76 = arith.addf %74, %75 : vector<16x1xf32>
    %77 = math.rsqrt %76 : vector<16x1xf32>
    %78 = vector.shape_cast %77 : vector<16x1xf32> to vector<16x1xf32>
    %79 = vector.broadcast %78 : vector<16x1xf32> to vector<16x128xf32>
    %80 = arith.select %68, %79, %63 : vector<16x128xi1>, vector<16x128xf32>
    %c32_i32_26 = arith.constant 32 : i32
    %81 = vector.broadcast %c32_i32_26 : i32 to vector<16x128xi32>
    %82 = arith.cmpi sge, %3, %81 : vector<16x128xi32>
    %c64_i32_27 = arith.constant 64 : i32
    %83 = vector.broadcast %c64_i32_27 : i32 to vector<16x128xi32>
    %84 = arith.cmpi slt, %3, %83 : vector<16x128xi32>
    %85 = arith.andi %82, %84 : vector<16x128xi1>
    %cst_28 = arith.constant 0.000000e+00 : f32
    %86 = vector.broadcast %cst_28 : f32 to vector<16x128xf32>
    %87 = arith.select %85, %62, %86 : vector<16x128xi1>, vector<16x128xf32>
    %cst_29 = arith.constant dense<0.000000e+00> : vector<16xf32>
    %88 = vector.multi_reduction <add>, %87, %cst_29 [1] : vector<16x128xf32> to vector<16xf32>
    %89 = vector.shape_cast %88 : vector<16xf32> to vector<16x1xf32>
    %cst_30 = arith.constant 3.125000e-02 : f32
    %90 = vector.broadcast %cst_30 : f32 to vector<16x1xf32>
    %91 = arith.mulf %89, %90 : vector<16x1xf32>
    %cst_31 = arith.constant 9.99999974E-6 : f32
    %92 = vector.broadcast %cst_31 : f32 to vector<16x1xf32>
    %93 = arith.addf %91, %92 : vector<16x1xf32>
    %94 = math.rsqrt %93 : vector<16x1xf32>
    %95 = vector.shape_cast %94 : vector<16x1xf32> to vector<16x1xf32>
    %96 = vector.broadcast %95 : vector<16x1xf32> to vector<16x128xf32>
    %97 = arith.select %85, %96, %80 : vector<16x128xi1>, vector<16x128xf32>
    %c64_i32_32 = arith.constant 64 : i32
    %98 = vector.broadcast %c64_i32_32 : i32 to vector<16x128xi32>
    %99 = arith.cmpi sge, %3, %98 : vector<16x128xi32>
    %c96_i32_33 = arith.constant 96 : i32
    %100 = vector.broadcast %c96_i32_33 : i32 to vector<16x128xi32>
    %101 = arith.cmpi slt, %3, %100 : vector<16x128xi32>
    %102 = arith.andi %99, %101 : vector<16x128xi1>
    %cst_34 = arith.constant 0.000000e+00 : f32
    %103 = vector.broadcast %cst_34 : f32 to vector<16x128xf32>
    %104 = arith.select %102, %62, %103 : vector<16x128xi1>, vector<16x128xf32>
    %cst_35 = arith.constant dense<0.000000e+00> : vector<16xf32>
    %105 = vector.multi_reduction <add>, %104, %cst_35 [1] : vector<16x128xf32> to vector<16xf32>
    %106 = vector.shape_cast %105 : vector<16xf32> to vector<16x1xf32>
    %cst_36 = arith.constant 3.125000e-02 : f32
    %107 = vector.broadcast %cst_36 : f32 to vector<16x1xf32>
    %108 = arith.mulf %106, %107 : vector<16x1xf32>
    %cst_37 = arith.constant 9.99999974E-6 : f32
    %109 = vector.broadcast %cst_37 : f32 to vector<16x1xf32>
    %110 = arith.addf %108, %109 : vector<16x1xf32>
    %111 = math.rsqrt %110 : vector<16x1xf32>
    %112 = vector.shape_cast %111 : vector<16x1xf32> to vector<16x1xf32>
    %113 = vector.broadcast %112 : vector<16x1xf32> to vector<16x128xf32>
    %114 = arith.select %102, %113, %97 : vector<16x128xi1>, vector<16x128xf32>
    %c96_i32_38 = arith.constant 96 : i32
    %115 = vector.broadcast %c96_i32_38 : i32 to vector<16x128xi32>
    %116 = arith.cmpi sge, %3, %115 : vector<16x128xi32>
    %c128_i32_39 = arith.constant 128 : i32
    %117 = vector.broadcast %c128_i32_39 : i32 to vector<16x128xi32>
    %118 = arith.cmpi slt, %3, %117 : vector<16x128xi32>
    %119 = arith.andi %116, %118 : vector<16x128xi1>
    %cst_40 = arith.constant 0.000000e+00 : f32
    %120 = vector.broadcast %cst_40 : f32 to vector<16x128xf32>
    %121 = arith.select %119, %62, %120 : vector<16x128xi1>, vector<16x128xf32>
    %cst_41 = arith.constant dense<0.000000e+00> : vector<16xf32>
    %122 = vector.multi_reduction <add>, %121, %cst_41 [1] : vector<16x128xf32> to vector<16xf32>
    %123 = vector.shape_cast %122 : vector<16xf32> to vector<16x1xf32>
    %cst_42 = arith.constant 3.125000e-02 : f32
    %124 = vector.broadcast %cst_42 : f32 to vector<16x1xf32>
    %125 = arith.mulf %123, %124 : vector<16x1xf32>
    %cst_43 = arith.constant 9.99999974E-6 : f32
    %126 = vector.broadcast %cst_43 : f32 to vector<16x1xf32>
    %127 = arith.addf %125, %126 : vector<16x1xf32>
    %128 = math.rsqrt %127 : vector<16x1xf32>
    %129 = vector.shape_cast %128 : vector<16x1xf32> to vector<16x1xf32>
    %130 = vector.broadcast %129 : vector<16x1xf32> to vector<16x128xf32>
    %131 = arith.select %119, %130, %114 : vector<16x128xi1>, vector<16x128xf32>
    %132 = arith.mulf %61, %131 : vector<16x128xf32>
    %133 = vector.broadcast %1 : vector<1x128xf32> to vector<16x128xf32>
    %134 = arith.mulf %132, %133 : vector<16x128xf32>
    %135 = vector.broadcast %2 : vector<1x128xf32> to vector<16x128xf32>
    %136 = arith.addf %134, %135 : vector<16x128xf32>
    %c0_44 = arith.constant 0 : index
    %c0_45 = arith.constant 0 : index
    %137 = vector.load %arg3[%c0_44, %c0_45] : memref<16x128xf32, #tpu.memory_space<vmem>>, vector<16x128xf32>
    tpu.vector_store %arg3[%c0_44, %c0_45], %136 {strides = array<i32>} : memref<16x128xf32, #tpu.memory_space<vmem>>, vector<16x128xf32>,
    return
  }
  func.func @transform_0(%arg0: i32) -> (i32, i32) {
    %c0_i32 = arith.constant 0 : i32
    %c0_i32_0 = arith.constant 0 : i32
    return %arg0, %c0_i32 : i32, i32
  }
  func.func @transform_1(%arg0: i32) -> (i32, i32) {
    %c0_i32 = arith.constant 0 : i32
    %c0_i32_0 = arith.constant 0 : i32
    %c0_i32_1 = arith.constant 0 : i32
    return %c0_i32, %c0_i32_0 : i32, i32
  }
  func.func @transform_2(%arg0: i32) -> (i32, i32) {
    %c0_i32 = arith.constant 0 : i32
    %c0_i32_0 = arith.constant 0 : i32
    return %arg0, %c0_i32 : i32, i32
  }
}

</mosaic_0001>

<llo_original>
// kernel: tile.9
$region0: #{tile.9}
  %s0 = inlined_call_operand.vmem [shape: f32[2,4,32], index: 0, kind: input, shape index: {}]
  %s1 = inlined_call_operand.vmem [shape: f32[2,128], index: 1, kind: output, shape index: {}]
  $region1: #{tile.9} parent=0
    #allocation0 [shape = 'u8[4096]{0}', space=vmem, size = 0x1000, scoped, tag = 'scoped mem for output reshape']
    #allocation1 [shape = 'u8[8192]{0}', space=vmem, size = 0x2000, scoped, tag = 'scoped mem for input reshape']
    %s3 = ssub.s32 16, 1
    %s4 = scalar_lea.vmem %s0, 4
    %v5 = vld [vmem:[%s4] sm:%s3]
    %s6 = scalar_lea.vmem [#allocation1], 8
    %7 = vst [vmem:[%s6] sm:%s3] %v5
    %v8 = vld [vmem:[%s0] sm:%s3]
    %9 = vst [vmem:[#allocation1] sm:%s3] %v8
    %s10 = smov 3
    %v11 = vld [vmem:[#allocation1] ss:$8 sm:%s10]
    %vm12 = vcmask 261120
    %13 = vst.msk [vmem:[#allocation0] sm:$0x3] %vm12, %v11
    %s14 = scalar_lea.vmem [#allocation1], 3
    %s15 = smov 3
    %v16 = vld [vmem:[%s14] ss:$8 sm:%s15]
    %17 = vrot.lane.b32.xlu0 %v16, 96
    %v18 = vpop.permute.xlu0 %17
    %vm19 = vcmask 1048320
    %20 = vst.msk [vmem:[#allocation0] sm:$0x3] %vm19, %v18
    %s21 = scalar_lea.vmem [#allocation1], 2
    %s22 = smov 3
    %v23 = vld [vmem:[%s21] ss:$8 sm:%s22]
    %24 = vrot.lane.b32.xlu0 %v23, 64
    %v25 = vpop.permute.xlu0 %24
    %vm26 = vcmask 785920
    %27 = vst.msk [vmem:[#allocation0] sm:$0x3] %vm26, %v25
    %s28 = scalar_lea.vmem [#allocation1], 1
    %s29 = smov 3
    %v30 = vld [vmem:[%s28] ss:$8 sm:%s29]
    %31 = vrot.lane.b32.xlu0 %v30, 32
    %v32 = vpop.permute.xlu0 %31
    %vm33 = vcmask 523520
    %34 = vst.msk [vmem:[#allocation0] sm:$0x3] %vm33, %v32
    %s36 = ssub.s32 4, 1
    %v37 = vld [vmem:[#allocation0] sm:%s36]
    %s39 = ssub.s32 4, 1
    %40 = vst [vmem:[%s1] sm:%s39] %v37

// kernel: with_bias_layernorm.1
$region0: #{with_bias_layernorm.1}
  #allocation0 [shape = 'u32[]', space=smem, size = 0x4, offset = 0x4, fixed_abs, tag = 'smem constant byte address 0x4 - core index']
  #allocation1 [shape = 'u32[72,128]{1,0:T(1,128)}', space=vmem, size = 0x9000, scoped, tag = 'internal scratch']
  %s0 = inlined_call_operand.vmem [shape: f32[32,128], index: 0, kind: input, shape index: {}]
  %s1 = inlined_call_operand.vmem [shape: f32[2,128], index: 1, kind: input, shape index: {}]
  %s2 = inlined_call_operand.vmem [shape: f32[32,128], index: 2, kind: output, shape index: {}]
  %s3 = sld [smem:[#allocation0]]
  $region41: #{with_bias_layernorm.1} parent=0
    _
  %s5 = ssub.s32 1, %s3
  %s6 = scalar_select 0, %s5, %s3
  loop: start=0, step=1, limit=4
  $region2: #{with_bias_layernorm.1} parent=0 // loop_pre_header
    _
  $region3: #{with_bias_layernorm.1} parent=0 // loop_header
    %s8 = sphi 0, %s12
    %p9 = scmp.ge.s32.totalorder %s8, 4
    %s18 = sphi 0, %s20
    %s21 = sphi 0, %s18
    %s22 = sphi 0, %s21
    %s38 = sphi 0, %s22
    %s42 = sphi 0, %s42
    %s44 = sphi 0, %s42
    %s45 = sphi 0, %s44
    %s59 = sphi 0, %s45
    %s65 = sphi 0, %s67
    %s68 = sphi 0, %s65
    %s69 = sphi 0, %s68
    %s85 = sphi 0, %s69
  $region4: #{with_bias_layernorm.1} parent=0 // loop_header_branch
    %11 = sbr.rel (%p9) target = $region8
  $region5: #{with_bias_layernorm.1} parent=0 // loop_body
    %s13 = ssub.s32 %s8, 1
    %s14 = ssub.s32 %s8, 2
    %s15 = sadd.s32 %s8, 1
    %s16 = ssub.s32 %s8, %s15
    %p17 = scmp.eq.s32.totalorder %s16, 0
    %s19 = sadd.s32 %s18, 1
    %s20 = scalar_select %p17, %s18, %s19
    %p23 = pneg %p17
    %p24 = scmp.eq.s32.totalorder %s8, 1
    %p25 = por %p23, %p24
    %p26 = scmp.ne.s32.totalorder %s18, %s21
    %p27 = scmp.eq.s32.totalorder %s8, 0
    %p28 = por %p26, %p27
    %p29 = scmp.ne.s32.totalorder %s18, %s21
    %p30 = scmp.eq.s32.totalorder %s13, 1
    %p31 = por %p29, %p30
    %p32 = scmp.ne.s32.totalorder %s21, %s22
    %p33 = scmp.eq.s32.totalorder %s13, 0
    %p34 = por %p32, %p33
    %p35 = scmp.ne.s32.totalorder %s21, %s22
    %p36 = scmp.eq.s32.totalorder %s14, 1
    %p37 = por %p35, %p36
    %p39 = scmp.ne.s32.totalorder %s22, %s38
    %p40 = scmp.eq.s32.totalorder %s14, 0
    %p41 = por %p39, %p40
    %s43 = sadd.s32 %s42, 1
    %p46 = scmp.eq.s32.totalorder %s8, 1
    %p47 = scmp.ne.s32.totalorder %s42, %s44
    %p48 = scmp.eq.s32.totalorder %s8, 0
    %p49 = por %p47, %p48
    %p50 = scmp.ne.s32.totalorder %s42, %s44
    %p51 = scmp.eq.s32.totalorder %s13, 1
    %p52 = por %p50, %p51
    %p53 = scmp.ne.s32.totalorder %s44, %s45
    %p54 = scmp.eq.s32.totalorder %s13, 0
    %p55 = por %p53, %p54
    %p56 = scmp.ne.s32.totalorder %s44, %s45
    %p57 = scmp.eq.s32.totalorder %s14, 1
    %p58 = por %p56, %p57
    %p60 = scmp.ne.s32.totalorder %s45, %s59
    %p61 = scmp.eq.s32.totalorder %s14, 0
    %p62 = por %p60, %p61
    %s63 = ssub.s32 %s8, %s15
    %p64 = scmp.eq.s32.totalorder %s63, 0
    %s66 = sadd.s32 %s65, 1
    %s67 = scalar_select %p64, %s65, %s66
    %p70 = pneg %p64
    %p71 = scmp.eq.s32.totalorder %s8, 1
    %p72 = por %p70, %p71
    %p73 = scmp.ne.s32.totalorder %s65, %s68
    %p74 = scmp.eq.s32.totalorder %s8, 0
    %p75 = por %p73, %p74
    %p76 = scmp.ne.s32.totalorder %s65, %s68
    %p77 = scmp.eq.s32.totalorder %s13, 1
    %p78 = por %p76, %p77
    %p79 = scmp.ne.s32.totalorder %s68, %s69
    %p80 = scmp.eq.s32.totalorder %s13, 0
    %p81 = por %p79, %p80
    %p82 = scmp.ne.s32.totalorder %s68, %s69
    %p83 = scmp.eq.s32.totalorder %s14, 1
    %p84 = por %p82, %p83
    %p86 = scmp.ne.s32.totalorder %s69, %s85
    %p87 = scmp.eq.s32.totalorder %s14, 0
    %p88 = por %p86, %p87
    %p89 = scmp.le.s32.totalorder 1, %s8
    %p90 = scmp.lt.s32.totalorder %s8, 3
    %p91 = pnand %p89, %p90
    %p92 = pneg %p91
    // Predicated region
    $region9: #{with_bias_layernorm.1} parent=5 // pred_check
      _
    $region10: #{with_bias_layernorm.1} parent=5 // pred_check_branch
      %94 = sbr.rel (%p91) target = $region12
    $region11: #{with_bias_layernorm.1} parent=5 // pred_region
      %s95 = ssub.s32 %s8, 1
      // Predicated region
      $region13: #{with_bias_layernorm.1} parent=11 // pred_check
        %p96 = pneg %p55
      $region14: #{with_bias_layernorm.1} parent=11 // pred_check_branch
        %98 = sbr.rel (%p96) target = $region16
      $region15: #{with_bias_layernorm.1} parent=11 // pred_region
        _
      $region16: #{with_bias_layernorm.1} parent=11 // pred_fallthru
        _
    $region12: #{with_bias_layernorm.1} parent=5 // pred_fallthru
      _
    %p99 = scmp.lt.s32.totalorder %s8, 2
    // Predicated region
    $region17: #{with_bias_layernorm.1} parent=5 // pred_check
      %p100 = pneg %p99
    $region18: #{with_bias_layernorm.1} parent=5 // pred_check_branch
      %102 = sbr.rel (%p100) target = $region20
    $region19: #{with_bias_layernorm.1} parent=5 // pred_region
      // Predicated region
      $region21: #{with_bias_layernorm.1} parent=19 // pred_check
        %p103 = pneg %p28
      $region22: #{with_bias_layernorm.1} parent=19 // pred_check_branch
        %105 = sbr.rel (%p103) target = $region24
      $region23: #{with_bias_layernorm.1} parent=19 // pred_region
        %s106 = smul.u32 2, %s8
        %p107 = scmp.lt.s32.totalorder %s106, 3
        %s108 = scalar_select %p107, %s106, 3
        %s109 = smul.addr %s108, 8
        %s110 = scalar_lea.vmem %s0, %s109
        %s111 = smul.u32 2, %s8
      $region24: #{with_bias_layernorm.1} parent=19 // pred_fallthru
        _
    $region20: #{with_bias_layernorm.1} parent=5 // pred_fallthru
      _
    %p112 = scmp.le.s32.totalorder 1, %s8
    %p113 = scmp.lt.s32.totalorder %s8, 3
    %p114 = pnand %p112, %p113
    %p115 = pneg %p114
    // Predicated region
    $region25: #{with_bias_layernorm.1} parent=5 // pred_check
      _
    $region26: #{with_bias_layernorm.1} parent=5 // pred_check_branch
      %117 = sbr.rel (%p114) target = $region28
    $region27: #{with_bias_layernorm.1} parent=5 // pred_region
      %s118 = ssub.s32 %s8, 1
      %s119 = smul.u32 2, %s13
      %p120 = scmp.lt.s32.totalorder %s119, 3
      %s121 = scalar_select %p120, %s119, 3
      %s122 = smul.addr %s121, 8
      %s123 = scalar_lea.vmem %s0, %s122
      %p124 = pneg %p34
      %p125 = pneg %p31
      %p126 = pneg %p55
      %p127 = pneg %p52
      %p128 = pneg %p81
      %p129 = pneg %p78
      %s130 = smul.u32 2, %s13
      %p131 = scmp.lt.s32.totalorder %s130, 3
      %s132 = scalar_select %p131, %s130, 3
      %s133 = smul.addr %s132, 8
      %s134 = scalar_lea.vmem %s2, %s133
      %s135 = smul.u32 2, %s13
      %p136 = scmp.lt.s32.totalorder %s135, 3
      %s137 = scalar_select %p136, %s135, 3
      %s138 = smul.addr %s137, 8
      %s139 = scalar_lea.vmem %s0, %s138
      %s140 = smul.u32 2, %s13
      %s141 = smul.u32 2, %s13
      %p142 = scmp.lt.s32.totalorder %s141, 3
      %s143 = scalar_select %p142, %s141, 3
      %s144 = smul.addr %s143, 8
      %s145 = scalar_lea.vmem %s2, %s144
      %s146 = smul.u32 2, %s13
      %v147 = vld [vmem:[%s139] sm:$0xff]
      %v148 = vld [vmem:[%s139 + $0x8] sm:$0xff]
      %v149 = vld [vmem:[%s1] sm:$0x1]
      %v150 = vld [vmem:[%s1 + $0x1] sm:$0x1]
      %v151 = vlaneseq
      %v152 = vand.u32 %v151, 127
      %vm153 = vcmp.ge.s32.totalorder %v152, 0
      %vm154 = vcmp.lt.s32.totalorder %v152, 32
      %vm155 = vmand %vm153, %vm154
      %v156 = vsel %vm155, %v147, 0.0
      %v157 = vsel %vm155, %v148, 0.0
      %158 = vadd.xlane.f32.xlu0 %v156
      %v159 = vpop.xlane.xlu0 %158
      %160 = vadd.xlane.f32.xlu0 %v157
      %v161 = vpop.xlane.xlu0 %160
      %v162 = vmul.f32 %v159, 0.03125
      %v163 = vmul.f32 %v161, 0.03125
      %v164 = vsel %vm155, %v162, 0.0
      %v165 = vsel %vm155, %v163, 0.0
      %vm166 = vcmp.ge.s32.totalorder %v152, 32
      %vm167 = vcmp.lt.s32.totalorder %v152, 64
      %vm168 = vmand %vm166, %vm167
      %v169 = vsel %vm168, %v147, 0.0
      %v170 = vsel %vm168, %v148, 0.0
      %171 = vadd.xlane.f32.xlu0 %v169
      %v172 = vpop.xlane.xlu0 %171
      %173 = vadd.xlane.f32.xlu0 %v170
      %v174 = vpop.xlane.xlu0 %173
      %v175 = vmul.f32 %v172, 0.03125
      %v176 = vmul.f32 %v174, 0.03125
      %v177 = vsel %vm168, %v175, %v164
      %v178 = vsel %vm168, %v176, %v165
      %vm179 = vcmp.ge.s32.totalorder %v152, 64
      %vm180 = vcmp.lt.s32.totalorder %v152, 96
      %vm181 = vmand %vm179, %vm180
      %v182 = vsel %vm181, %v147, 0.0
      %v183 = vsel %vm181, %v148, 0.0
      %184 = vadd.xlane.f32.xlu0 %v182
      %v185 = vpop.xlane.xlu0 %184
      %186 = vadd.xlane.f32.xlu0 %v183
      %v187 = vpop.xlane.xlu0 %186
      %v188 = vmul.f32 %v185, 0.03125
      %v189 = vmul.f32 %v187, 0.03125
      %v190 = vsel %vm181, %v188, %v177
      %v191 = vsel %vm181, %v189, %v178
      %vm192 = vcmp.ge.s32.totalorder %v152, 96
      %vm193 = vcmp.lt.s32.totalorder %v152, 128
      %vm194 = vmand %vm192, %vm193
      %v195 = vsel %vm194, %v147, 0.0
      %v196 = vsel %vm194, %v148, 0.0
      %197 = vadd.xlane.f32.xlu0 %v195
      %v198 = vpop.xlane.xlu0 %197
      %199 = vadd.xlane.f32.xlu0 %v196
      %v200 = vpop.xlane.xlu0 %199
      %v201 = vmul.f32 %v198, 0.03125
      %v202 = vmul.f32 %v200, 0.03125
      %v203 = vsel %vm194, %v201, %v190
      %v204 = vsel %vm194, %v202, %v191
      %v205 = vsub.f32 %v147, %v203
      %v206 = vsub.f32 %v148, %v204
      %v207 = vmul.f32 %v205, %v205
      %v208 = vmul.f32 %v206, %v206
      %v209 = vsel %vm155, %v207, 0.0
      %v210 = vsel %vm155, %v208, 0.0
      %211 = vadd.xlane.f32.xlu0 %v209
      %v212 = vpop.xlane.xlu0 %211
      %213 = vadd.xlane.f32.xlu0 %v210
      %v214 = vpop.xlane.xlu0 %213
      %v215 = vmul.f32 %v212, 0.03125
      %v216 = vmul.f32 %v214, 0.03125
      %v217 = vadd.f32 %v215, 1e-05
      %v218 = vadd.f32 %v216, 1e-05
      %v219 = vrsqrt.pop %v217
      %v220 = vmul.f32 %v219, %v217
      %v221 = vmul.f32 %v220, %v219
      %v222 = vmul.f32 0.5, %v221
      %v223 = vsub.f32 1.5, %v222
      %v224 = vmul.f32 %v219, %v223
      %vm225 = vweird.f32 %v217
      %vm226 = vweird.f32 %v219
      %vm227 = vmor %vm225, %vm226
      %v228 = vsel %vm227, %v219, %v224
      %v229 = vrsqrt.pop %v218
      %v230 = vmul.f32 %v229, %v218
      %v231 = vmul.f32 %v230, %v229
      %v232 = vmul.f32 0.5, %v231
      %v233 = vsub.f32 1.5, %v232
      %v234 = vmul.f32 %v229, %v233
      %vm235 = vweird.f32 %v218
      %vm236 = vweird.f32 %v229
      %vm237 = vmor %vm235, %vm236
      %v238 = vsel %vm237, %v229, %v234
      %v239 = vsel %vm155, %v228, 0.0
      %v240 = vsel %vm155, %v238, 0.0
      %v241 = vsel %vm168, %v207, 0.0
      %v242 = vsel %vm168, %v208, 0.0
      %243 = vadd.xlane.f32.xlu0 %v241
      %v244 = vpop.xlane.xlu0 %243
      %245 = vadd.xlane.f32.xlu0 %v242
      %v246 = vpop.xlane.xlu0 %245
      %v247 = vmul.f32 %v244, 0.03125
      %v248 = vmul.f32 %v246, 0.03125
      %v249 = vadd.f32 %v247, 1e-05
      %v250 = vadd.f32 %v248, 1e-05
      %v251 = vrsqrt.pop %v249
      %v252 = vmul.f32 %v251, %v249
      %v253 = vmul.f32 %v252, %v251
      %v254 = vmul.f32 0.5, %v253
      %v255 = vsub.f32 1.5, %v254
      %v256 = vmul.f32 %v251, %v255
      %vm257 = vweird.f32 %v249
      %vm258 = vweird.f32 %v251
      %vm259 = vmor %vm257, %vm258
      %v260 = vsel %vm259, %v251, %v256
      %v261 = vrsqrt.pop %v250
      %v262 = vmul.f32 %v261, %v250
      %v263 = vmul.f32 %v262, %v261
      %v264 = vmul.f32 0.5, %v263
      %v265 = vsub.f32 1.5, %v264
      %v266 = vmul.f32 %v261, %v265
      %vm267 = vweird.f32 %v250
      %vm268 = vweird.f32 %v261
      %vm269 = vmor %vm267, %vm268
      %v270 = vsel %vm269, %v261, %v266
      %v271 = vsel %vm168, %v260, %v239
      %v272 = vsel %vm168, %v270, %v240
      %v273 = vsel %vm181, %v207, 0.0
      %v274 = vsel %vm181, %v208, 0.0
      %275 = vadd.xlane.f32.xlu0 %v273
      %v276 = vpop.xlane.xlu0 %275
      %277 = vadd.xlane.f32.xlu0 %v274
      %v278 = vpop.xlane.xlu0 %277
      %v279 = vmul.f32 %v276, 0.03125
      %v280 = vmul.f32 %v278, 0.03125
      %v281 = vadd.f32 %v279, 1e-05
      %v282 = vadd.f32 %v280, 1e-05
      %v283 = vrsqrt.pop %v281
      %v284 = vmul.f32 %v283, %v281
      %v285 = vmul.f32 %v284, %v283
      %v286 = vmul.f32 0.5, %v285
      %v287 = vsub.f32 1.5, %v286
      %v288 = vmul.f32 %v283, %v287
      %vm289 = vweird.f32 %v281
      %vm290 = vweird.f32 %v283
      %vm291 = vmor %vm289, %vm290
      %v292 = vsel %vm291, %v283, %v288
      %v293 = vrsqrt.pop %v282
      %v294 = vmul.f32 %v293, %v282
      %v295 = vmul.f32 %v294, %v293
      %v296 = vmul.f32 0.5, %v295
      %v297 = vsub.f32 1.5, %v296
      %v298 = vmul.f32 %v293, %v297
      %vm299 = vweird.f32 %v282
      %vm300 = vweird.f32 %v293
      %vm301 = vmor %vm299, %vm300
      %v302 = vsel %vm301, %v293, %v298
      %v303 = vsel %vm181, %v292, %v271
      %v304 = vsel %vm181, %v302, %v272
      %v305 = vsel %vm194, %v207, 0.0
      %v306 = vsel %vm194, %v208, 0.0
      %307 = vadd.xlane.f32.xlu0 %v305
      %v308 = vpop.xlane.xlu0 %307
      %309 = vadd.xlane.f32.xlu0 %v306
      %v310 = vpop.xlane.xlu0 %309
      %v311 = vmul.f32 %v308, 0.03125
      %v312 = vmul.f32 %v310, 0.03125
      %v313 = vadd.f32 %v311, 1e-05
      %v314 = vadd.f32 %v312, 1e-05
      %v315 = vrsqrt.pop %v313
      %v316 = vmul.f32 %v315, %v313
      %v317 = vmul.f32 %v316, %v315
      %v318 = vmul.f32 0.5, %v317
      %v319 = vsub.f32 1.5, %v318
      %v320 = vmul.f32 %v315, %v319
      %vm321 = vweird.f32 %v313
      %vm322 = vweird.f32 %v315
      %vm323 = vmor %vm321, %vm322
      %v324 = vsel %vm323, %v315, %v320
      %v325 = vrsqrt.pop %v314
      %v326 = vmul.f32 %v325, %v314
      %v327 = vmul.f32 %v326, %v325
      %v328 = vmul.f32 0.5, %v327
      %v329 = vsub.f32 1.5, %v328
      %v330 = vmul.f32 %v325, %v329
      %vm331 = vweird.f32 %v314
      %vm332 = vweird.f32 %v325
      %vm333 = vmor %vm331, %vm332
      %v334 = vsel %vm333, %v325, %v330
      %v335 = vsel %vm194, %v324, %v303
      %v336 = vsel %vm194, %v334, %v304
      %v337 = vmul.f32 %v205, %v335
      %v338 = vmul.f32 %v206, %v336
      %v339 = vperm.slane %v149, 0
      %v340 = vmul.f32 %v337, %v339
      %v341 = vmul.f32 %v338, %v339
      %v342 = vperm.slane %v150, 0
      %v343 = vadd.f32 %v340, %v342
      %v344 = vadd.f32 %v341, %v342
      %345 = vst [vmem:[%s145] sm:$0xff] %v343
      %346 = vst [vmem:[%s145 + $0x8] sm:$0xff] %v344
      %s347 = smul.u32 2, %s13
      %p348 = scmp.lt.s32.totalorder %s347, 3
      %s349 = scalar_select %p348, %s347, 3
      %s350 = smul.addr %s349, 8
      %s351 = scalar_lea.vmem %s2, %s350
      // Predicated region
      $region29: #{with_bias_layernorm.1} parent=27 // pred_check
        %p352 = pneg %p78
      $region30: #{with_bias_layernorm.1} parent=27 // pred_check_branch
        %354 = sbr.rel (%p352) target = $region32
      $region31: #{with_bias_layernorm.1} parent=27 // pred_region
        %s355 = smul.u32 2, %s13
      $region32: #{with_bias_layernorm.1} parent=27 // pred_fallthru
        _
    $region28: #{with_bias_layernorm.1} parent=5 // pred_fallthru
      _
    %p356 = scmp.le.s32.totalorder 2, %s8
    // Predicated region
    $region33: #{with_bias_layernorm.1} parent=5 // pred_check
      %p357 = pneg %p356
    $region34: #{with_bias_layernorm.1} parent=5 // pred_check_branch
      %359 = sbr.rel (%p357) target = $region36
    $region35: #{with_bias_layernorm.1} parent=5 // pred_region
      %s360 = ssub.s32 %s8, 2
      // Predicated region
      $region37: #{with_bias_layernorm.1} parent=35 // pred_check
        %p361 = pneg %p84
      $region38: #{with_bias_layernorm.1} parent=35 // pred_check_branch
        %363 = sbr.rel (%p361) target = $region40
      $region39: #{with_bias_layernorm.1} parent=35 // pred_region
        %s364 = smul.u32 2, %s14
        %p365 = scmp.lt.s32.totalorder %s364, 3
        %s366 = scalar_select %p365, %s364, 3
        %s367 = smul.addr %s366, 8
        %s368 = scalar_lea.vmem %s2, %s367
      $region40: #{with_bias_layernorm.1} parent=35 // pred_fallthru
        _
    $region36: #{with_bias_layernorm.1} parent=5 // pred_fallthru
      _
  $region6: #{with_bias_layernorm.1} parent=0 // loop_footer
    %s12 = sadd.s32 1, %s8
  $region7: #{with_bias_layernorm.1} parent=0 // loop_footer_branch
    %7 = sbr.rel target = $region3
  $region8: #{with_bias_layernorm.1} parent=0 // loop_exit
    _

</llo_original>
